<compile_context>
chip_gen: v7x
topology: tpu7x:2x2x1
jax: 0.10.0
libtpu: 0.0.40
codegen_flags: <defaults>
</compile_context>

<pallas_src>
import functools
import math

import jax
import jax.numpy as jnp
from jax.experimental import pallas as pl
from jax.experimental.pallas import tpu as pltpu


# 8192 rows x 128 lanes = 1 Mi elements / block:
#   f32 input  -> 4 MiB native block (8 MiB double-buffered input stream)
#   any dtype  -> f32 compute intermediates stay at 4 MiB / block
_MAX_BLOCK_ROWS = 8192
_VMEM_LIMIT_BYTES = 48 * 1024 * 1024     # > v5e 16 MiB default, < v7x 64 MiB physical
_MIN_PALLAS_ELEMENTS = 1 << 20           # below this, plain jnp reduce is as fast


def _gan_loss_kernel(params_ref, pred_ref, out_ref, *, gan_mode, block_elems,
                     n_valid, num_inner):
    """Accumulates per-lane partial sums of the loss term into out_ref.

    params_ref : SMEM (1,) f32 -> [target_label]
    pred_ref   : VMEM (block_rows, 128) block of the flattened prediction
    out_ref    : VMEM (8, 128) f32 resident per-core partial-sum accumulator
    """
    c = pl.program_id(0)     # "parallel" axis (dual TensorCore split on v7x)
    i = pl.program_id(1)     # "arbitrary" streaming-reduction axis

    @pl.when(i == 0)
    def _init():
        out_ref[...] = jnp.zeros_like(out_ref)

    p = pred_ref[...].astype(jnp.float32)
    target = params_ref[0]

    if gan_mode == "lsgan":
        # nn.MSELoss(): mean((p - t)^2)
        d = p - target
        term = d * d
    elif gan_mode == "vanilla":
        # nn.BCEWithLogitsLoss(): mean(max(p,0) - p*t + log1p(exp(-|p|)))
        term = jnp.maximum(p, 0.0) - p * target + jnp.log1p(jnp.exp(-jnp.abs(p)))
    elif gan_mode == "wgangp":
        term = p   # wgangp sign is folded into the wrapper-side scale
    else:
        raise NotImplementedError(f"gan mode {gan_mode} not implemented")

    # Remaining valid elements starting at this block's global offset.
    gblock = c * num_inner + i
    rem = n_valid - gblock * block_elems

    def _accum(t):
        # tile-aligned (block_rows,128) -> (block_rows//8,8,128) reshape; the
        # leading-axis sum is plain VPU adds into the resident accumulator.
        out_ref[...] += t.reshape(-1, 8, 128).sum(axis=0)

    @pl.when(rem >= block_elems)       # steady state: block fully valid
    def _steady():
        _accum(term)

    @pl.when(rem < block_elems)        # tail block / clamped duplicate block
    def _tail():
        rows, cols = term.shape
        row_i = jax.lax.broadcasted_iota(jnp.int32, (rows, cols), 0)
        col_i = jax.lax.broadcasted_iota(jnp.int32, (rows, cols), 1)
        lin = row_i * cols + col_i     # block-local indices: no int32 overflow
        # select (NOT multiply-by-mask): padded garbage may be NaN/Inf in
        # vanilla mode and must not leak through.
        _accum(jnp.where(lin < rem, term, 0.0))


def _loss_jnp(prediction, target, sign, gan_mode):
    """Plain-jnp loss (fallback path for small predictions)."""
    p = prediction.astype(jnp.float32)
    if gan_mode == "lsgan":
        return jnp.mean(jnp.square(p - target))
    if gan_mode == "vanilla":
        return jnp.mean(jnp.maximum(p, 0.0) - p * target
                        + jnp.log1p(jnp.exp(-jnp.abs(p))))
    return sign * jnp.mean(p)


def _make_forward(gan_mode, real_label, fake_label, min_pallas_elements,
                  max_block_rows):
    """Builds a jitted forward fn: (prediction, target_is_real_bool) -> scalar."""
    use_sign = gan_mode == "wgangp"

    def forward(prediction, target_is_real):
        n = math.prod(prediction.shape) if prediction.ndim else 1
        if n == 0:
            raise ValueError("GANLoss: empty prediction")

        target = jnp.where(target_is_real,
                           jnp.float32(real_label), jnp.float32(fake_label))
        sign = (jnp.where(target_is_real, jnp.float32(-1.0), jnp.float32(1.0))
                if use_sign else jnp.float32(1.0))

        # Small predictions are dispatch-bound: XLA's fused reduce is as fast.
        if n < min_pallas_elements:
            return _loss_jnp(prediction, target, sign, gan_mode)

        flat = jnp.reshape(prediction, (-1,))     # native dtype on the wire
        pad = (-n) % 1024                         # keep rows a multiple of 8
        if pad:
            flat = jnp.pad(flat, (0, pad))        # tiny pad, masked in-kernel
        rows = flat.shape[0] // 128
        slab = jnp.reshape(flat, (rows, 128))

        block_rows = min(rows, max_block_rows)
        num_blocks = -(-rows // block_rows)
        num_outer = 2 if num_blocks >= 2 else 1   # dual-TensorCore split (v7x)
        num_inner = -(-num_blocks // num_outer)
        block_elems = block_rows * 128

        if num_outer * num_inner == num_blocks:
            pred_map = lambda c, i: (c * num_inner + i, 0)
        else:
            # Odd split: clamp the one extra grid step onto the last valid
            # block (kept in-bounds for the DMA); its contribution is fully
            # masked in-kernel since rem <= 0 there.
            last_blk = num_blocks - 1
            pred_map = lambda c, i: (jnp.minimum(c * num_inner + i, last_blk), 0)

        kernel = functools.partial(
            _gan_loss_kernel,
            gan_mode=gan_mode,
            block_elems=block_elems,
            n_valid=n,
            num_inner=num_inner,
        )

        partials = pl.pallas_call(
            kernel,
            out_shape=jax.ShapeDtypeStruct((num_outer, 8, 128), jnp.float32),
            grid=(num_outer, num_inner),
            in_specs=[
                pl.BlockSpec(memory_space=pltpu.MemorySpace.SMEM),   # target label
                pl.BlockSpec((block_rows, 128), pred_map),           # prediction slab
            ],
            out_specs=pl.BlockSpec((None, 8, 128), lambda c, i: (c, 0, 0)),
            compiler_params=pltpu.CompilerParams(
                dimension_semantics=("parallel", "arbitrary"),
                vmem_limit_bytes=_VMEM_LIMIT_BYTES),
        )(jnp.reshape(target, (1,)), slab)

        # Final tiny cross-lane reduce + (sign / n) scale outside the kernel.
        return jnp.sum(partials) * (sign / jnp.float32(n))

    return jax.jit(forward)


class GANLossPallas:
    """JAX/Pallas equivalent of the PyTorch GANLoss module (forward pass)."""

    def __init__(self, gan_mode, target_real_label=1.0, target_fake_label=0.0,
                 min_pallas_elements=_MIN_PALLAS_ELEMENTS,
                 max_block_rows=_MAX_BLOCK_ROWS):
        if gan_mode not in ("lsgan", "vanilla", "wgangp"):
            raise NotImplementedError(f"gan mode {gan_mode} not implemented")
        if max_block_rows % 8:
            raise ValueError("max_block_rows must be a multiple of 8")
        self.gan_mode = gan_mode
        self.real_label = float(target_real_label)
        self.fake_label = float(target_fake_label)
        self._forward = _make_forward(gan_mode, self.real_label, self.fake_label,
                                      int(min_pallas_elements), int(max_block_rows))

    def __call__(self, prediction, target_is_real):
        flag = jnp.asarray(target_is_real, dtype=jnp.bool_)
        return self._forward(prediction, flag)


def _reference(prediction, gan_mode, target_is_real,
               real_label=1.0, fake_label=0.0):
    p = jnp.asarray(prediction).astype(jnp.float32)
    if gan_mode == "lsgan":
        t = real_label if target_is_real else fake_label
        return jnp.mean((p - t) ** 2)
    if gan_mode == "vanilla":
        t = real_label if target_is_real else fake_label
        return jnp.mean(jnp.maximum(p, 0.0) - p * t + jnp.log1p(jnp.exp(-jnp.abs(p))))
    return -jnp.mean(p) if target_is_real else jnp.mean(p)


if __name__ == "__main__":
    key = jax.random.PRNGKey(0)
    k0, k1, k2 = jax.random.split(key, 3)

    cases = [
        # (name, prediction, max_block_rows for the test)
        # small PatchGAN-like discriminator output (NCHW), single block
        ("small",  jax.random.normal(k0, (2, 4, 16, 16), dtype=jnp.float32),
         _MAX_BLOCK_ROWS),
        # non-lane-aligned element count -> exercises the in-kernel tail mask
        ("ragged", jax.random.normal(k1, (1, 1, 30, 30), dtype=jnp.float32),
         _MAX_BLOCK_ROWS),
        # tiny block cap -> multi-block grid, dual-outer split, clamped block
        ("multi",  jax.random.normal(k2, (2, 4, 96, 96), dtype=jnp.float32),
         64),
    ]

    ok = True
    for name, pred, mbr in cases:
        for mode in ("lsgan", "vanilla", "wgangp"):
            # force the Pallas path even for these small test shapes
            crit = GANLossPallas(mode, min_pallas_elements=0, max_block_rows=mbr)
            for flag in (True, False):
                got = float(jax.block_until_ready(crit(pred, flag)))
                want = float(_reference(pred, mode, flag))
                if abs(got - want) > 1e-4 + 1e-4 * abs(want):
                    ok = False
                    print(f"MISMATCH {name} {mode} real={flag}: "
                          f"got={got} want={want}")

    # default config: small predictions take the plain-jnp fallback path
    crit_default = GANLossPallas("lsgan")
    got = float(jax.block_until_ready(crit_default(cases[0][1], True)))
    want = float(_reference(cases[0][1], "lsgan", True))
    if abs(got - want) > 1e-5 + 1e-5 * abs(want):
        ok = False
        print(f"MISMATCH fallback lsgan real=True: got={got} want={want}")

    if ok:
        print("KERNEL_OK")
</pallas_src>

<mosaic_0001>
module attributes {stable_mosaic.version = 11 : i64} {
  func.func @_gan_loss_kernel(%arg0: i32, %arg1: i32, %arg2: memref<1xf32, #tpu.memory_space<smem>>, %arg3: memref<16x128xf32, #tpu.memory_space<vmem>>, %arg4: memref<1x8x128xf32, #tpu.memory_space<vmem>>) attributes {dimension_semantics = [#tpu.dimension_semantics<parallel>, #tpu.dimension_semantics<arbitrary>], iteration_bounds = array<i64: 1, 1>, scalar_prefetch = 0 : i64, scratch_operands = 0 : i64, tpu.core_type = #tpu.core_type<tc>, window_params = [{transform_indices = @transform_0, window_bounds = array<i64: 1>}, {transform_indices = @transform_1, window_bounds = array<i64: 16, 128>}, {transform_indices = @transform_2, window_bounds = array<i64: 1, 8, 128>}]} {
    %c0_i32 = arith.constant 0 : i32
    %0 = arith.cmpi eq, %arg1, %c0_i32 : i32
    %1 = arith.extui %0 : i1 to i32
    %c0_i32_0 = arith.constant 0 : i32
    %2 = arith.cmpi ne, %1, %c0_i32_0 : i32
    scf.if %2 {
      %cst = arith.constant 0.000000e+00 : f32
      %18 = vector.broadcast %cst : f32 to vector<8x128xf32>
      %c0_8 = arith.constant 0 : index
      %c0_9 = arith.constant 0 : index
      %c0_10 = arith.constant 0 : index
      %19 = vector.load %arg4[%c0_8, %c0_9, %c0_10] : memref<1x8x128xf32, #tpu.memory_space<vmem>>, vector<1x8x128xf32>
      %20 = vector.shape_cast %19 : vector<1x8x128xf32> to vector<8x128xf32>
      %21 = vector.shape_cast %18 : vector<8x128xf32> to vector<1x8x128xf32>
      tpu.vector_store %arg4[%c0_8, %c0_9, %c0_10], %21 {strides = array<i32>} : memref<1x8x128xf32, #tpu.memory_space<vmem>>, vector<1x8x128xf32>,
    } else {
    }
    %c0 = arith.constant 0 : index
    %c0_1 = arith.constant 0 : index
    %3 = vector.load %arg3[%c0, %c0_1] : memref<16x128xf32, #tpu.memory_space<vmem>>, vector<16x128xf32>
    %c0_2 = arith.constant 0 : index
    %4 = memref.load %arg2[%c0_2] : memref<1xf32, #tpu.memory_space<smem>>
    %5 = vector.broadcast %4 : f32 to vector<16x128xf32>
    %6 = arith.subf %3, %5 : vector<16x128xf32>
    %7 = arith.mulf %6, %6 : vector<16x128xf32>
    %c1_i32 = arith.constant 1 : i32
    %8 = arith.muli %arg0, %c1_i32 : i32
    %9 = arith.addi %8, %arg1 : i32
    %c2048_i32 = arith.constant 2048 : i32
    %10 = arith.muli %9, %c2048_i32 : i32
    %c2048_i32_3 = arith.constant 2048 : i32
    %11 = arith.subi %c2048_i32_3, %10 : i32
    %c2048_i32_4 = arith.constant 2048 : i32
    %12 = arith.cmpi sge, %11, %c2048_i32_4 : i32
    %13 = arith.extui %12 : i1 to i32
    %c0_i32_5 = arith.constant 0 : i32
    %14 = arith.cmpi ne, %13, %c0_i32_5 : i32
    scf.if %14 {
      %c0_8 = arith.constant 0 : index
      %c0_9 = arith.constant 0 : index
      %c0_10 = arith.constant 0 : index
      %18 = vector.load %arg4[%c0_8, %c0_9, %c0_10] : memref<1x8x128xf32, #tpu.memory_space<vmem>>, vector<1x8x128xf32>
      %19 = vector.shape_cast %18 : vector<1x8x128xf32> to vector<8x128xf32>
      %20 = vector.shape_cast %7 : vector<16x128xf32> to vector<2x8x128xf32>
      %cst = arith.constant dense<0.000000e+00> : vector<8x128xf32>
      %21 = vector.multi_reduction <add>, %20, %cst [0] : vector<2x8x128xf32> to vector<8x128xf32>
      %22 = arith.addf %19, %21 : vector<8x128xf32>
      %c0_11 = arith.constant 0 : index
      %c0_12 = arith.constant 0 : index
      %c0_13 = arith.constant 0 : index
      %23 = vector.load %arg4[%c0_11, %c0_12, %c0_13] : memref<1x8x128xf32, #tpu.memory_space<vmem>>, vector<1x8x128xf32>
      %24 = vector.shape_cast %23 : vector<1x8x128xf32> to vector<8x128xf32>
      %25 = vector.shape_cast %22 : vector<8x128xf32> to vector<1x8x128xf32>
      tpu.vector_store %arg4[%c0_11, %c0_12, %c0_13], %25 {strides = array<i32>} : memref<1x8x128xf32, #tpu.memory_space<vmem>>, vector<1x8x128xf32>,
    } else {
    }
    %c2048_i32_6 = arith.constant 2048 : i32
    %15 = arith.cmpi slt, %11, %c2048_i32_6 : i32
    %16 = arith.extui %15 : i1 to i32
    %c0_i32_7 = arith.constant 0 : i32
    %17 = arith.cmpi ne, %16, %c0_i32_7 : i32
    scf.if %17 {
      %18 = tpu.iota {dimensions = array<i32: 0>} : vector<16x128xi32>
      %19 = tpu.iota {dimensions = array<i32: 1>} : vector<16x128xi32>
      %c128_i32 = arith.constant 128 : i32
      %20 = vector.broadcast %c128_i32 : i32 to vector<16x128xi32>
      %21 = arith.muli %18, %20 : vector<16x128xi32>
      %22 = arith.addi %21, %19 : vector<16x128xi32>
      %23 = vector.broadcast %11 : i32 to vector<16x128xi32>
      %24 = arith.cmpi slt, %22, %23 : vector<16x128xi32>
      %cst = arith.constant 0.000000e+00 : f32
      %25 = vector.broadcast %cst : f32 to vector<16x128xf32>
      %26 = arith.select %24, %7, %25 : vector<16x128xi1>, vector<16x128xf32>
      %c0_8 = arith.constant 0 : index
      %c0_9 = arith.constant 0 : index
      %c0_10 = arith.constant 0 : index
      %27 = vector.load %arg4[%c0_8, %c0_9, %c0_10] : memref<1x8x128xf32, #tpu.memory_space<vmem>>, vector<1x8x128xf32>
      %28 = vector.shape_cast %27 : vector<1x8x128xf32> to vector<8x128xf32>
      %29 = vector.shape_cast %26 : vector<16x128xf32> to vector<2x8x128xf32>
      %cst_11 = arith.constant dense<0.000000e+00> : vector<8x128xf32>
      %30 = vector.multi_reduction <add>, %29, %cst_11 [0] : vector<2x8x128xf32> to vector<8x128xf32>
      %31 = arith.addf %28, %30 : vector<8x128xf32>
      %c0_12 = arith.constant 0 : index
      %c0_13 = arith.constant 0 : index
      %c0_14 = arith.constant 0 : index
      %32 = vector.load %arg4[%c0_12, %c0_13, %c0_14] : memref<1x8x128xf32, #tpu.memory_space<vmem>>, vector<1x8x128xf32>
      %33 = vector.shape_cast %32 : vector<1x8x128xf32> to vector<8x128xf32>
      %34 = vector.shape_cast %31 : vector<8x128xf32> to vector<1x8x128xf32>
      tpu.vector_store %arg4[%c0_12, %c0_13, %c0_14], %34 {strides = array<i32>} : memref<1x8x128xf32, #tpu.memory_space<vmem>>, vector<1x8x128xf32>,
    } else {
    }
    return
  }
  func.func @transform_0(%arg0: i32, %arg1: i32) -> i32 {
    %c0_i32 = arith.constant 0 : i32
    %c0_i32_0 = arith.constant 0 : i32
    return %c0_i32 : i32
  }
  func.func @transform_1(%arg0: i32, %arg1: i32) -> (i32, i32) {
    %c1_i32 = arith.constant 1 : i32
    %0 = arith.muli %arg0, %c1_i32 : i32
    %1 = arith.addi %0, %arg1 : i32
    %c0_i32 = arith.constant 0 : i32
    %c0_i32_0 = arith.constant 0 : i32
    return %1, %c0_i32 : i32, i32
  }
  func.func @transform_2(%arg0: i32, %arg1: i32) -> (i32, i32, i32) {
    %c0_i32 = arith.constant 0 : i32
    %c0_i32_0 = arith.constant 0 : i32
    %c0_i32_1 = arith.constant 0 : i32
    return %arg0, %c0_i32, %c0_i32_0 : i32, i32, i32
  }
}

</mosaic_0001>

<llo_original>
// kernel: forward.1
$region0: #{forward.1}
  #allocation0 [shape = 'u32[]', space=smem, size = 0x4, offset = 0x4, fixed_abs, tag = 'smem constant byte address 0x4 - core index']
  #allocation1 [shape = 'u32[144,128]{1,0:T(1,128)}', space=vmem, size = 0x12000, scoped, tag = 'internal scratch']
  #allocation2 [shape = 'f32[1]{0:T(128)S(6)}', space=smem, size = 0x200, scoped, tag = 'scoped memory for forward.1']
  %s0 = inlined_call_operand.<no memory space> [shape: f32[1], index: 0, kind: input, shape index: {}]
  %s1 = inlined_call_operand.vmem [shape: f32[16,128], index: 1, kind: input, shape index: {}]
  %s2 = inlined_call_operand.vmem [shape: f32[1,8,128], index: 2, kind: output, shape index: {}]
  %s3 = sld [smem:[#allocation0]]
  $region30: #{forward.1} parent=0
    _
  %s5 = ssub.s32 1, %s3
  %s6 = scalar_select 0, %s5, %s3
  %7 = sst [smem:[#allocation2]] %s0
  // Predicated region
  $region2: #{forward.1} parent=0 // pred_check
    _
  $region3: #{forward.1} parent=0 // pred_check_branch
    %9 = sbr.rel (0) target = $region5
  $region4: #{forward.1} parent=0 // pred_region
    _
  $region5: #{forward.1} parent=0 // pred_fallthru
    _
  // Predicated region
  $region6: #{forward.1} parent=0 // pred_check
    _
  $region7: #{forward.1} parent=0 // pred_check_branch
    %11 = sbr.rel (0) target = $region9
  $region8: #{forward.1} parent=0 // pred_region
    %s12 = sadd.s32 0, 0
    %s13 = smul.u32 2, %s12
    %p14 = scmp.lt.s32.totalorder %s13, 1
    %s15 = scalar_select %p14, %s13, 1
    %s16 = smul.addr %s15, 8
    %s17 = scalar_lea.vmem %s1, %s16
    %s18 = sadd.s32 0, 0
    %s19 = smul.u32 2, %s18
  $region9: #{forward.1} parent=0 // pred_fallthru
    _
  %s20 = sadd.s32 0, 0
  %s21 = smul.u32 2, %s20
  %p22 = scmp.lt.s32.totalorder %s21, 1
  %s23 = scalar_select %p22, %s21, 1
  %s24 = smul.addr %s23, 8
  %s25 = scalar_lea.vmem %s1, %s24
  %s26 = sadd.s32 0, 0
  %s27 = smul.u32 2, %s26
  %p28 = scmp.lt.s32.totalorder %s27, 1
  %s29 = scalar_select %p28, %s27, 1
  %s30 = smul.addr %s29, 8
  %s31 = scalar_lea.vmem %s1, %s30
  %s32 = sadd.s32 0, 0
  %s33 = smul.u32 2, %s32
  %p34 = scmp.eq.s32.totalorder 0, 0
  // Predicated region
  $region10: #{forward.1} parent=0 // pred_check
    %p35 = pneg %p34
  $region11: #{forward.1} parent=0 // pred_check_branch
    %37 = sbr.rel (%p35) target = $region13
  $region12: #{forward.1} parent=0 // pred_region
    %38 = vst [vmem:[%s2] sm:$0xff] 0.0
  $region13: #{forward.1} parent=0 // pred_fallthru
    _
  %v39 = vld [vmem:[%s31] sm:$0xff]
  %v40 = vld [vmem:[%s31 + $0x8] sm:$0xff]
  %s41 = sld [smem:[#allocation2]]
  %v42 = vstv %s41
  %v43 = vsub.f32 %v39, %v42
  %v44 = vsub.f32 %v40, %v42
  %v45 = vmul.f32 %v43, %v43
  %v46 = vmul.f32 %v44, %v44
  %s47 = sadd.s32 0, 0
  %s48 = smul.u32 %s47, 2048
  %s49 = ssub.s32 2048, %s48
  %p50 = scmp.ge.s32.totalorder %s49, 2048
  // Predicated region
  $region14: #{forward.1} parent=0 // pred_check
    %p51 = pneg %p50
  $region15: #{forward.1} parent=0 // pred_check_branch
    %53 = sbr.rel (%p51) target = $region17
  $region16: #{forward.1} parent=0 // pred_region
    %v54 = vld [vmem:[%s2] sm:$0xff]
    %v55 = vadd.f32 %v45, %v46
    %v56 = vadd.f32 %v54, %v55
    %57 = vst [vmem:[%s2] sm:$0xff] %v56
  $region17: #{forward.1} parent=0 // pred_fallthru
    _
  %p58 = scmp.lt.s32.totalorder %s49, 2048
  // Predicated region
  $region18: #{forward.1} parent=0 // pred_check
    %p59 = pneg %p58
  $region19: #{forward.1} parent=0 // pred_check_branch
    %61 = sbr.rel (%p59) target = $region21
  $region20: #{forward.1} parent=0 // pred_region
    %v62 = vlaneseq
    %v63 = vshrl.u32 %v62, 7
    %v64 = vadd.s32 %v63, 8
    %v65 = vlaneseq
    %v66 = vand.u32 %v65, 127
    %v67 = vmul.u32 %v63, 128
    %v68 = vmul.u32 %v64, 128
    %v69 = vadd.s32 %v67, %v66
    %v70 = vadd.s32 %v68, %v66
    %v71 = vstv %s49
    %vm72 = vcmp.lt.s32.totalorder %v69, %v71
    %vm73 = vcmp.lt.s32.totalorder %v70, %v71
    %v74 = vsel %vm72, %v45, 0.0
    %v75 = vsel %vm73, %v46, 0.0
    %v76 = vld [vmem:[%s2] sm:$0xff]
    %v77 = vadd.f32 %v74, %v75
    %v78 = vadd.f32 %v76, %v77
    %79 = vst [vmem:[%s2] sm:$0xff] %v78
  $region21: #{forward.1} parent=0 // pred_fallthru
    _
  // Predicated region
  $region22: #{forward.1} parent=0 // pred_check
    _
  $region23: #{forward.1} parent=0 // pred_check_branch
    %81 = sbr.rel (0) target = $region25
  $region24: #{forward.1} parent=0 // pred_region
    _
  $region25: #{forward.1} parent=0 // pred_fallthru
    _
  // Predicated region
  $region26: #{forward.1} parent=0 // pred_check
    _
  $region27: #{forward.1} parent=0 // pred_check_branch
    %83 = sbr.rel (0) target = $region29
  $region28: #{forward.1} parent=0 // pred_region
    _
  $region29: #{forward.1} parent=0 // pred_fallthru
    _

</llo_original>
